<compile_context>
chip_gen: v6e
topology: v6e:2x2x1
jax: 0.10.0
libtpu: 0.0.40
codegen_flags: <defaults>
</compile_context>

<pallas_src>
import functools

import jax
import jax.numpy as jnp
from jax import lax
from jax.experimental import pallas as pl
from jax.experimental.pallas import tpu as pltpu


def bigru_kernel(maxlen_ref, len_ref, x_ref,
                 wih_ref, bih_ref, whh_ref, bhhn_ref,
                 out_ref, gi_ref, *, seq_len, batch, hidden_dim):
    T, B, H = seq_len, batch, hidden_dim
    H2, H3, H6 = 2 * H, 3 * H, 6 * H

    max_len = maxlen_ref[0]                                  # dynamic trip count (SMEM)

    # Hoisted input projection: one bf16 MXU matmul, f32 accumulate, biases folded once.
    # Row t*B + b of gi_ref is the projection of x[b, t]:
    #   cols [0:3H)  = forward  [r_f | z_f | n_f]   (bih + bhh_r/bhh_z already added)
    #   cols [3H:6H) = backward [r_b | z_b | n_b]
    gi_ref[...] = (jnp.dot(x_ref[...], wih_ref[...],
                           preferred_element_type=jnp.float32) + bih_ref[...])

    # Hoisted loop invariants.
    len_b = jnp.broadcast_to(len_ref[...], (B, H))           # (B, H) int32
    whh = whh_ref[...]                                       # (2H, 6H) bf16 block-diagonal
    bhh_n = jnp.broadcast_to(bhhn_ref[...], (B, H2))         # (B, 2H) = [b_hn_f | b_hn_b]

    # Live hidden state lives directly in the output ref: [h_fwd | h_bwd].
    out_ref[...] = jnp.zeros_like(out_ref)

    def step(t, carry):
        tb = max_len - 1 - t                                 # backward direction timestep

        h = out_ref[...]                                     # (B, 2H)
        h_f = h[:, 0:H]
        h_b = h[:, H:H2]

        # Fused recurrent projection for both directions (block-diagonal W_hh), bf16 MXU.
        # TODO(synk): at production H (>=256) use two per-direction matmuls instead.
        gh = jnp.dot(h.astype(whh.dtype), whh,
                     preferred_element_type=jnp.float32)     # (B, 6H), bias already folded

        gi_f = gi_ref[pl.ds(pl.multiple_of(t * B, B), B), pl.ds(0, H3)]    # (B, 3H)
        gi_b = gi_ref[pl.ds(pl.multiple_of(tb * B, B), B), pl.ds(H3, H3)]  # (B, 3H)

        # ---- forward direction (gate order r, z, n): one sigmoid over the rz slab.
        rz_f = jax.nn.sigmoid(gi_f[:, 0:H2] + gh[:, 0:H2])
        n_f = jnp.tanh(gi_f[:, H2:H3] + rz_f[:, 0:H] * (gh[:, H2:H3] + bhh_n[:, 0:H]))
        z_f = rz_f[:, H:H2]
        h_f_new = (1.0 - z_f) * n_f + z_f * h_f

        # ---- backward direction.
        rz_b = jax.nn.sigmoid(gi_b[:, 0:H2] + gh[:, H3:H3 + H2])
        n_b = jnp.tanh(gi_b[:, H2:H3] + rz_b[:, 0:H] * (gh[:, H3 + H2:H6] + bhh_n[:, H:H2]))
        z_b = rz_b[:, H:H2]
        h_b_new = (1.0 - z_b) * n_b + z_b * h_b

        # Per-sequence length masking (pack_padded_sequence emulation); direct half-writes.
        out_ref[:, pl.ds(0, H)] = jnp.where(len_b > t, h_f_new, h_f)
        out_ref[:, pl.ds(H, H)] = jnp.where(len_b > tb, h_b_new, h_b)
        return carry

    lax.fori_loop(0, max_len, step, 0)


def bidirectional_gru(embeddings, lengths, params):
    """embeddings: (B, T, E) float, lengths: (B,) int -> (B, 2H) f32."""
    B_in, T, E = embeddings.shape
    H = params["wih_f"].shape[0] // 3
    f32, bf16 = jnp.float32, jnp.bfloat16

    # Pad batch to a sublane multiple (padded rows get length 0 -> hidden state stays 0).
    # TODO(synk): pad/pack to >=128/256 rows + parallel batch grid for production (v7x 2 TCs).
    B = ((B_in + 7) // 8) * 8
    x = embeddings.astype(f32)
    lengths_i32 = lengths.astype(jnp.int32)
    if B != B_in:
        x = jnp.pad(x, ((0, B - B_in), (0, 0), (0, 0)))
        lengths_i32 = jnp.pad(lengths_i32, (0, B - B_in))

    # Time-major, flattened: row t*B + b == embeddings[b, t, :]; bf16 for the MXU.
    x_tm = jnp.transpose(x, (1, 0, 2)).reshape(T * B, E).astype(bf16)

    # Fused weights: direction-major columns, gate order (r, z, n) within each direction.
    # TODO(synk): pad H so gate column boundaries hit 128-lane multiples at production sizes.
    wih = jnp.concatenate([params["wih_f"].T, params["wih_b"].T], axis=1).astype(bf16)  # (E, 6H)
    zeros_h3 = jnp.zeros((H, 3 * H), f32)
    whh = jnp.concatenate([
        jnp.concatenate([params["whh_f"].T.astype(f32), zeros_h3], axis=1),
        jnp.concatenate([zeros_h3, params["whh_b"].T.astype(f32)], axis=1),
    ], axis=0).astype(bf16)                                                             # (2H, 6H)

    # Fold b_ih + (r,z part of b_hh) into the hoisted projection bias; keep n-gate b_hh
    # separate (it is multiplied by r inside the recurrence).
    def fold(bih, bhh):
        return jnp.concatenate([bih[:2 * H] + bhh[:2 * H], bih[2 * H:]])

    bih = jnp.concatenate([fold(params["bih_f"], params["bhh_f"]),
                           fold(params["bih_b"], params["bhh_b"])]
                          ).reshape(1, 6 * H).astype(f32)
    bhh_n = jnp.concatenate([params["bhh_f"][2 * H:],
                             params["bhh_b"][2 * H:]]).reshape(1, 2 * H).astype(f32)

    max_len = jnp.max(lengths_i32).reshape(1)            # (1,) -> SMEM scalar (dynamic trip count)
    len_col = lengths_i32.reshape(B, 1)                  # (B, 1) -> VMEM for masking

    kernel = functools.partial(bigru_kernel, seq_len=T, batch=B, hidden_dim=H)
    smem = pl.BlockSpec(memory_space=pltpu.MemorySpace.SMEM)
    vmem = pl.BlockSpec(memory_space=pltpu.MemorySpace.VMEM)

    out = pl.pallas_call(
        kernel,
        out_shape=jax.ShapeDtypeStruct((B, 2 * H), f32),
        in_specs=[smem, vmem, vmem, vmem, vmem, vmem, vmem],
        out_specs=vmem,
        scratch_shapes=[
            pltpu.VMEM((T * B, 6 * H), f32),   # precomputed input-gate projections
        ],
        compiler_params=pltpu.CompilerParams(
            # Headroom above the scoped default (16/32 MiB) while staying well under every
            # chip's physical VMEM; at production sizes budget x + gi against 64 MiB/TC (v7x)
            # and chunk the projection over T (or store gi in bf16) if it does not fit.
            vmem_limit_bytes=32 * 1024 * 1024,
        ),
    )(max_len, len_col, x_tm, wih, bih, whh, bhh_n)
    return out[:B_in]


def _reference_bigru(embeddings, lengths, params):
    """Pure-JAX f32 reference (same masked-recurrence math) for a sanity check."""
    B, T, E = embeddings.shape
    H = params["wih_f"].shape[0] // 3

    def cell(x_t, h, wih, whh, bih, bhh):
        gi = x_t @ wih.T + bih
        gh = h @ whh.T + bhh
        r = jax.nn.sigmoid(gi[:, :H] + gh[:, :H])
        z = jax.nn.sigmoid(gi[:, H:2 * H] + gh[:, H:2 * H])
        n = jnp.tanh(gi[:, 2 * H:] + r * gh[:, 2 * H:])
        return (1.0 - z) * n + z * h

    h_f = jnp.zeros((B, H), jnp.float32)
    h_b = jnp.zeros((B, H), jnp.float32)
    lens = lengths.reshape(B, 1)
    for t in range(T):
        h_f_new = cell(embeddings[:, t, :], h_f,
                       params["wih_f"], params["whh_f"],
                       params["bih_f"], params["bhh_f"])
        h_f = jnp.where(t < lens, h_f_new, h_f)
        tb = T - 1 - t
        h_b_new = cell(embeddings[:, tb, :], h_b,
                       params["wih_b"], params["whh_b"],
                       params["bih_b"], params["bhh_b"])
        h_b = jnp.where(tb < lens, h_b_new, h_b)
    return jnp.concatenate([h_f, h_b], axis=1)


if __name__ == "__main__":
    B, T, E, H = 8, 8, 32, 32

    key = jax.random.PRNGKey(0)
    k_x, k_w = jax.random.split(key)

    embeddings = jax.random.normal(k_x, (B, T, E), dtype=jnp.float32)
    lengths = jnp.array([8, 5, 3, 8, 2, 7, 4, 6], dtype=jnp.int32)

    # PyTorch-style init: uniform(-1/sqrt(H), 1/sqrt(H)); gate order r, z, n.
    bound = 1.0 / jnp.sqrt(jnp.float32(H))
    names_shapes = [
        ("wih_f", (3 * H, E)), ("whh_f", (3 * H, H)),
        ("bih_f", (3 * H,)), ("bhh_f", (3 * H,)),
        ("wih_b", (3 * H, E)), ("whh_b", (3 * H, H)),
        ("bih_b", (3 * H,)), ("bhh_b", (3 * H,)),
    ]
    keys = jax.random.split(k_w, len(names_shapes))
    params = {
        name: jax.random.uniform(k, shape, jnp.float32, -bound, bound)
        for (name, shape), k in zip(names_shapes, keys)
    }

    out = bidirectional_gru(embeddings, lengths, params)
    out = jax.block_until_ready(out)

    ref = _reference_bigru(embeddings, lengths, params)
    assert out.shape == (B, 2 * H)
    # Tolerance loosened vs the pure-f32 reference because the kernel runs its MXU
    # matmuls in bf16 (f32 accumulation), per the performance review.
    assert jnp.allclose(out, ref, atol=3e-2, rtol=3e-2), "Pallas kernel mismatch vs reference"

    print("KERNEL_OK")
</pallas_src>

<mosaic_0001>
module attributes {stable_mosaic.version = 11 : i64} {
  func.func @bigru_kernel(%arg0: memref<1xi32, #tpu.memory_space<smem>>, %arg1: memref<8x1xi32, #tpu.memory_space<vmem>>, %arg2: memref<64x32xbf16, #tpu.memory_space<vmem>>, %arg3: memref<32x192xbf16, #tpu.memory_space<vmem>>, %arg4: memref<1x192xf32, #tpu.memory_space<vmem>>, %arg5: memref<64x192xbf16, #tpu.memory_space<vmem>>, %arg6: memref<1x64xf32, #tpu.memory_space<vmem>>, %arg7: memref<8x64xf32, #tpu.memory_space<vmem>>, %arg8: memref<64x192xf32, #tpu.memory_space<vmem>>) attributes {dimension_semantics = [], scalar_prefetch = 0 : i64, scratch_operands = 1 : i64, tpu.core_type = #tpu.core_type<tc>} {
    %c0 = arith.constant 0 : index
    %0 = memref.load %arg0[%c0] : memref<1xi32, #tpu.memory_space<smem>>
    %c0_0 = arith.constant 0 : index
    %c0_1 = arith.constant 0 : index
    %1 = vector.load %arg2[%c0_0, %c0_1] : memref<64x32xbf16, #tpu.memory_space<vmem>>, vector<64x32xbf16>
    %c0_2 = arith.constant 0 : index
    %c0_3 = arith.constant 0 : index
    %2 = vector.load %arg3[%c0_2, %c0_3] : memref<32x192xbf16, #tpu.memory_space<vmem>>, vector<32x192xbf16>
    %cst = arith.constant dense<0.000000e+00> : vector<64x192xf32>
    %3 = tpu.matmul %1, %2, %cst {dimension_numbers = #tpu.dot_dimension_numbers<[1], [0], [0], [1], [0, 0, 1, 1], [], []>} : vector<64x32xbf16>, vector<32x192xbf16>, vector<64x192xf32> -> vector<64x192xf32>
    %c0_4 = arith.constant 0 : index
    %c0_5 = arith.constant 0 : index
    %4 = vector.load %arg4[%c0_4, %c0_5] : memref<1x192xf32, #tpu.memory_space<vmem>>, vector<1x192xf32>
    %5 = vector.broadcast %4 : vector<1x192xf32> to vector<64x192xf32>
    %6 = arith.addf %3, %5 : vector<64x192xf32>
    %c0_6 = arith.constant 0 : index
    %c0_7 = arith.constant 0 : index
    %7 = vector.load %arg8[%c0_6, %c0_7] : memref<64x192xf32, #tpu.memory_space<vmem>>, vector<64x192xf32>
    tpu.vector_store %arg8[%c0_6, %c0_7], %6 {strides = array<i32>} : memref<64x192xf32, #tpu.memory_space<vmem>>, vector<64x192xf32>,
    %c0_8 = arith.constant 0 : index
    %c0_9 = arith.constant 0 : index
    %8 = vector.load %arg1[%c0_8, %c0_9] : memref<8x1xi32, #tpu.memory_space<vmem>>, vector<8x1xi32>
    %9 = vector.shape_cast %8 : vector<8x1xi32> to vector<8x1xi32>
    %10 = vector.broadcast %9 : vector<8x1xi32> to vector<8x32xi32>
    %c0_10 = arith.constant 0 : index
    %c0_11 = arith.constant 0 : index
    %11 = vector.load %arg5[%c0_10, %c0_11] : memref<64x192xbf16, #tpu.memory_space<vmem>>, vector<64x192xbf16>
    %c0_12 = arith.constant 0 : index
    %c0_13 = arith.constant 0 : index
    %12 = vector.load %arg6[%c0_12, %c0_13] : memref<1x64xf32, #tpu.memory_space<vmem>>, vector<1x64xf32>
    %13 = vector.shape_cast %12 : vector<1x64xf32> to vector<1x64xf32>
    %14 = vector.broadcast %13 : vector<1x64xf32> to vector<8x64xf32>
    %cst_14 = arith.constant 0.000000e+00 : f32
    %15 = vector.broadcast %cst_14 : f32 to vector<8x64xf32>
    %c0_15 = arith.constant 0 : index
    %c0_16 = arith.constant 0 : index
    %16 = vector.load %arg7[%c0_15, %c0_16] : memref<8x64xf32, #tpu.memory_space<vmem>>, vector<8x64xf32>
    tpu.vector_store %arg7[%c0_15, %c0_16], %15 {strides = array<i32>} : memref<8x64xf32, #tpu.memory_space<vmem>>, vector<8x64xf32>,
    %c0_i32 = arith.constant 0 : i32
    %c0_i32_17 = arith.constant 0 : i32
    %17 = arith.subi %0, %c0_i32_17 : i32
    %18 = arith.addi %c0_i32_17, %17 : i32
    %c1_i32 = arith.constant 1 : i32
    scf.for %arg9 = %c0_i32_17 to %18 step %c1_i32  : i32 {
      %c1_i32_18 = arith.constant 1 : i32
      %19 = arith.subi %0, %c1_i32_18 : i32
      %20 = arith.subi %19, %arg9 : i32
      %c0_19 = arith.constant 0 : index
      %c0_20 = arith.constant 0 : index
      %21 = vector.load %arg7[%c0_19, %c0_20] : memref<8x64xf32, #tpu.memory_space<vmem>>, vector<8x64xf32>
      %22 = vector.extract_strided_slice %21 {offsets = [0, 0], sizes = [8, 32], strides = [1, 1]} : vector<8x64xf32> to vector<8x32xf32>
      %23 = vector.extract_strided_slice %21 {offsets = [0, 32], sizes = [8, 32], strides = [1, 1]} : vector<8x64xf32> to vector<8x32xf32>
      %24 = arith.truncf %21 : vector<8x64xf32> to vector<8x64xbf16>
      %cst_21 = arith.constant dense<0.000000e+00> : vector<8x192xf32>
      %25 = tpu.matmul %24, %11, %cst_21 {dimension_numbers = #tpu.dot_dimension_numbers<[1], [0], [0], [1], [0, 0, 1, 1], [], []>} : vector<8x64xbf16>, vector<64x192xbf16>, vector<8x192xf32> -> vector<8x192xf32>
      %c8_i32 = arith.constant 8 : i32
      %26 = arith.muli %arg9, %c8_i32 : i32
      %27 = tpu.assume_multiple %26, 8 : i32
      %28 = arith.index_cast %27 : i32 to index
      %c0_22 = arith.constant 0 : index
      %29 = vector.load %arg8[%28, %c0_22] : memref<64x192xf32, #tpu.memory_space<vmem>>, vector<8x96xf32>
      %c8_i32_23 = arith.constant 8 : i32
      %30 = arith.muli %20, %c8_i32_23 : i32
      %31 = tpu.assume_multiple %30, 8 : i32
      %32 = arith.index_cast %31 : i32 to index
      %c96 = arith.constant 96 : index
      %33 = vector.load %arg8[%32, %c96] : memref<64x192xf32, #tpu.memory_space<vmem>>, vector<8x96xf32>
      %34 = vector.extract_strided_slice %29 {offsets = [0, 0], sizes = [8, 64], strides = [1, 1]} : vector<8x96xf32> to vector<8x64xf32>
      %35 = vector.extract_strided_slice %25 {offsets = [0, 0], sizes = [8, 64], strides = [1, 1]} : vector<8x192xf32> to vector<8x64xf32>
      %36 = arith.addf %34, %35 : vector<8x64xf32>
      %37 = arith.negf %36 : vector<8x64xf32>
      %38 = math.exp %37 : vector<8x64xf32>
      %cst_24 = arith.constant 1.000000e+00 : f32
      %39 = vector.broadcast %cst_24 : f32 to vector<8x64xf32>
      %40 = arith.addf %39, %38 : vector<8x64xf32>
      %41 = arith.divf %39, %40 : vector<8x64xf32>
      %42 = vector.extract_strided_slice %29 {offsets = [0, 64], sizes = [8, 32], strides = [1, 1]} : vector<8x96xf32> to vector<8x32xf32>
      %43 = vector.extract_strided_slice %41 {offsets = [0, 0], sizes = [8, 32], strides = [1, 1]} : vector<8x64xf32> to vector<8x32xf32>
      %44 = vector.extract_strided_slice %25 {offsets = [0, 64], sizes = [8, 32], strides = [1, 1]} : vector<8x192xf32> to vector<8x32xf32>
      %45 = vector.extract_strided_slice %14 {offsets = [0, 0], sizes = [8, 32], strides = [1, 1]} : vector<8x64xf32> to vector<8x32xf32>
      %46 = arith.addf %44, %45 : vector<8x32xf32>
      %47 = arith.mulf %43, %46 : vector<8x32xf32>
      %48 = arith.addf %42, %47 : vector<8x32xf32>
      %49 = math.tanh %48 : vector<8x32xf32>
      %50 = vector.extract_strided_slice %41 {offsets = [0, 32], sizes = [8, 32], strides = [1, 1]} : vector<8x64xf32> to vector<8x32xf32>
      %cst_25 = arith.constant 1.000000e+00 : f32
      %51 = vector.broadcast %cst_25 : f32 to vector<8x32xf32>
      %52 = arith.subf %51, %50 : vector<8x32xf32>
      %53 = arith.mulf %52, %49 : vector<8x32xf32>
      %54 = arith.mulf %50, %22 : vector<8x32xf32>
      %55 = arith.addf %53, %54 : vector<8x32xf32>
      %56 = vector.extract_strided_slice %33 {offsets = [0, 0], sizes = [8, 64], strides = [1, 1]} : vector<8x96xf32> to vector<8x64xf32>
      %57 = vector.extract_strided_slice %25 {offsets = [0, 96], sizes = [8, 64], strides = [1, 1]} : vector<8x192xf32> to vector<8x64xf32>
      %58 = arith.addf %56, %57 : vector<8x64xf32>
      %59 = arith.negf %58 : vector<8x64xf32>
      %60 = math.exp %59 : vector<8x64xf32>
      %cst_26 = arith.constant 1.000000e+00 : f32
      %61 = vector.broadcast %cst_26 : f32 to vector<8x64xf32>
      %62 = arith.addf %61, %60 : vector<8x64xf32>
      %63 = arith.divf %61, %62 : vector<8x64xf32>
      %64 = vector.extract_strided_slice %33 {offsets = [0, 64], sizes = [8, 32], strides = [1, 1]} : vector<8x96xf32> to vector<8x32xf32>
      %65 = vector.extract_strided_slice %63 {offsets = [0, 0], sizes = [8, 32], strides = [1, 1]} : vector<8x64xf32> to vector<8x32xf32>
      %66 = vector.extract_strided_slice %25 {offsets = [0, 160], sizes = [8, 32], strides = [1, 1]} : vector<8x192xf32> to vector<8x32xf32>
      %67 = vector.extract_strided_slice %14 {offsets = [0, 32], sizes = [8, 32], strides = [1, 1]} : vector<8x64xf32> to vector<8x32xf32>
      %68 = arith.addf %66, %67 : vector<8x32xf32>
      %69 = arith.mulf %65, %68 : vector<8x32xf32>
      %70 = arith.addf %64, %69 : vector<8x32xf32>
      %71 = math.tanh %70 : vector<8x32xf32>
      %72 = vector.extract_strided_slice %63 {offsets = [0, 32], sizes = [8, 32], strides = [1, 1]} : vector<8x64xf32> to vector<8x32xf32>
      %cst_27 = arith.constant 1.000000e+00 : f32
      %73 = vector.broadcast %cst_27 : f32 to vector<8x32xf32>
      %74 = arith.subf %73, %72 : vector<8x32xf32>
      %75 = arith.mulf %74, %71 : vector<8x32xf32>
      %76 = arith.mulf %72, %23 : vector<8x32xf32>
      %77 = arith.addf %75, %76 : vector<8x32xf32>
      %78 = vector.broadcast %arg9 : i32 to vector<8x32xi32>
      %79 = arith.cmpi sgt, %10, %78 : vector<8x32xi32>
      %80 = arith.select %79, %55, %22 : vector<8x32xi1>, vector<8x32xf32>
      %c0_28 = arith.constant 0 : index
      %c0_29 = arith.constant 0 : index
      %81 = vector.load %arg7[%c0_28, %c0_29] : memref<8x64xf32, #tpu.memory_space<vmem>>, vector<8x32xf32>
      tpu.vector_store %arg7[%c0_28, %c0_29], %80 {strides = array<i32>} : memref<8x64xf32, #tpu.memory_space<vmem>>, vector<8x32xf32>,
      %82 = vector.broadcast %20 : i32 to vector<8x32xi32>
      %83 = arith.cmpi sgt, %10, %82 : vector<8x32xi32>
      %84 = arith.select %83, %77, %23 : vector<8x32xi1>, vector<8x32xf32>
      %c0_30 = arith.constant 0 : index
      %c32 = arith.constant 32 : index
      %85 = vector.load %arg7[%c0_30, %c32] : memref<8x64xf32, #tpu.memory_space<vmem>>, vector<8x32xf32>
      tpu.vector_store %arg7[%c0_30, %c32], %84 {strides = array<i32>} : memref<8x64xf32, #tpu.memory_space<vmem>>, vector<8x32xf32>,
    }
    return
  }
}

</mosaic_0001>

<llo_original>
// kernel: tpu_custom_call.1
$region0: #{tpu_custom_call.1}
  #allocation0 [shape = 'u32[]', space=smem, size = 0x4, offset = 0x4, fixed_abs, tag = 'smem constant byte address 0x4 - core index']
  #allocation1 [shape = 'u32[144,128]{1,0:T(1,128)}', space=vmem, size = 0x12000, scoped, tag = 'internal scratch']
  #allocation2 [shape = 'f32[64,192]{1,0:T(8,128)}', space=vmem, size = 0x10000, scoped, tag = 'scratch operand']
  #allocation3 [shape = 's32[1]{0:T(128)S(6)}', space=smem, size = 0x200, scoped, tag = 'scoped memory for tpu_custom_call.1']
  %s0 = inlined_call_operand.<no memory space> [shape: s32[1], index: 0, kind: input, shape index: {}]
  %s1 = inlined_call_operand.vmem [shape: s32[8,1], index: 1, kind: input, shape index: {}]
  %s2 = inlined_call_operand.vmem [shape: bf16[64,32], index: 2, kind: input, shape index: {}]
  %s3 = inlined_call_operand.hbm [shape: bf16[32,192], index: 3, kind: input, shape index: {}]
  %s4 = inlined_call_operand.vmem [shape: f32[1,192], index: 4, kind: input, shape index: {}]
  %s5 = inlined_call_operand.vmem [shape: bf16[64,192], index: 5, kind: input, shape index: {}]
  %s6 = inlined_call_operand.vmem [shape: f32[1,64], index: 6, kind: input, shape index: {}]
  %s7 = inlined_call_operand.hbm [shape: f32[8,64], index: 7, kind: output, shape index: {}]
  %s8 = sld [smem:[#allocation0]]
  $region49: #{tpu_custom_call.1} parent=0
    _
  %s10 = ssub.s32 1, %s8
  %s11 = scalar_select 0, %s10, %s8
  %12 = sst [smem:[#allocation3]] %s0
  $region1: #{tpu_custom_call.1} parent=0
    #allocation4 [shape = 'u8[16384]{0}', space=vmem, size = 0x4000, scoped, tag = 'input window, operand 3, single buffered']
    #allocation5 [shape = 's32[1]{0}', space=sflag, size = 0x4, scoped, tag = 'scoped memory for tpu_custom_call.1']
    #allocation6 [shape = 's32[1]{0}', space=sflag, size = 0x4, scoped, tag = 'scoped memory for tpu_custom_call.1']
    #allocation7 [shape = 'u8[4096]{0}', space=vmem, size = 0x1000, scoped, tag = 'output window, operand 0, single buffered']
    %13 = vsyncpa [#allocation5], 0
    %14 = vsyncpa [#allocation6], 0
    // Predicated region
    $region2: #{tpu_custom_call.1} parent=1 // pred_check
      _
    $region3: #{tpu_custom_call.1} parent=1 // pred_check_branch
      %16 = sbr.rel (0) target = $region5
    $region4: #{tpu_custom_call.1} parent=1 // pred_region
      _
    $region5: #{tpu_custom_call.1} parent=1 // pred_fallthru
      _
    // Predicated region
    $region6: #{tpu_custom_call.1} parent=1 // pred_check
      _
    $region7: #{tpu_custom_call.1} parent=1 // pred_check_branch
      %18 = sbr.rel (0) target = $region9
    $region8: #{tpu_custom_call.1} parent=1 // pred_region
      _
    $region9: #{tpu_custom_call.1} parent=1 // pred_fallthru
      _
    // Predicated region
    $region10: #{tpu_custom_call.1} parent=1 // pred_check
      _
    $region11: #{tpu_custom_call.1} parent=1 // pred_check_branch
      %20 = sbr.rel (0) target = $region13
    $region12: #{tpu_custom_call.1} parent=1 // pred_region
      _
    $region13: #{tpu_custom_call.1} parent=1 // pred_fallthru
      _
    // Predicated region
    $region14: #{tpu_custom_call.1} parent=1 // pred_check
      _
    $region15: #{tpu_custom_call.1} parent=1 // pred_check_branch
      %22 = sbr.rel (0) target = $region17
    $region16: #{tpu_custom_call.1} parent=1 // pred_region
      %s24 = ssub.s32 512, 512
      %25 = vsyncadd [#allocation5], %s24
      %s26 = sshll.u32 [#allocation4], 4
      %s27 = int_to_ptr.vmem [resolvable:$true] %s26
      %32 = dma.hbm_to_vmem [thread:$0]  %s3, 512, %s27, [#allocation5], 128, 128, 8
    $region17: #{tpu_custom_call.1} parent=1 // pred_fallthru
      _
    // Predicated region
    $region18: #{tpu_custom_call.1} parent=1 // pred_check
      _
    $region19: #{tpu_custom_call.1} parent=1 // pred_check_branch
      %34 = sbr.rel (0) target = $region21
    $region20: #{tpu_custom_call.1} parent=1 // pred_region
      _
    $region21: #{tpu_custom_call.1} parent=1 // pred_fallthru
      _
    // Predicated region
    $region22: #{tpu_custom_call.1} parent=1 // pred_check
      _
    $region23: #{tpu_custom_call.1} parent=1 // pred_check_branch
      %36 = sbr.rel (0) target = $region25
    $region24: #{tpu_custom_call.1} parent=1 // pred_region
      _
    $region25: #{tpu_custom_call.1} parent=1 // pred_fallthru
      _
    // Predicated region
    $region26: #{tpu_custom_call.1} parent=1 // pred_check
      _
    $region27: #{tpu_custom_call.1} parent=1 // pred_check_branch
      %38 = sbr.rel (0) target = $region29
    $region28: #{tpu_custom_call.1} parent=1 // pred_region
      _
    $region29: #{tpu_custom_call.1} parent=1 // pred_fallthru
      _
    // Predicated region
    $region30: #{tpu_custom_call.1} parent=1 // pred_check
      _
    $region31: #{tpu_custom_call.1} parent=1 // pred_check_branch
      %40 = sbr.rel (0) target = $region33
    $region32: #{tpu_custom_call.1} parent=1 // pred_region
      %41 = dma.done [#allocation5], 512
    $region33: #{tpu_custom_call.1} parent=1 // pred_fallthru
      _
    %s43 = sld [smem:[#allocation3]]
    %v44 = vld [vmem:[%s2] sm:$0xf]
    %v45 = vld [vmem:[%s2 + $0x4] sm:$0xf]
    %v46 = vld [vmem:[%s2 + $0x8] sm:$0xf]
    %v47 = vld [vmem:[%s2 + $0xc] sm:$0xf]
    %v48 = vld [vmem:[%s2 + $0x10] sm:$0xf]
    %v49 = vld [vmem:[%s2 + $0x14] sm:$0xf]
    %v50 = vld [vmem:[%s2 + $0x18] sm:$0xf]
    %v51 = vld [vmem:[%s2 + $0x1c] sm:$0xf]
    %v52 = vld [vmem:[#allocation4] sm:$0xff]
    %v53 = vld [vmem:[#allocation4 + $0x8] sm:$0xff]
    %v54 = vld [vmem:[#allocation4 + $0x10] sm:$0xff]
    %v55 = vld [vmem:[#allocation4 + $0x18] sm:$0xff]
    %v56 = vld [vmem:[%s4] sm:$0x3]
    %v58 = vlaneseq
    %v59 = vshrl.u32 %v58, 7
    %v60 = vsub.s32 0, %v59
    %v61 = vrot.slane %v56, %v60
    %v62 = vlaneseq
    %v63 = vshrl.u32 %v62, 7
    %v64 = vsub.s32 1, %v63
    %v65 = vrot.slane %v56, %v64
    %v76 = vunpack.c.l.b16 %v44
    %v77 = vunpack.c.l.b16 %v45
    %v78 = vunpack.c.l.b16 %v46
    %v79 = vunpack.c.l.b16 %v47
    %v80 = vunpack.c.l.b16 %v48
    %v81 = vunpack.c.l.b16 %v49
    %v82 = vunpack.c.l.b16 %v50
    %v83 = vunpack.c.l.b16 %v51
    %v84 = vpack.c.b16 %v77, %v76
    %v85 = vpack.c.b16 %v79, %v78
    %v86 = vpack.c.b16 %v81, %v80
    %v87 = vpack.c.b16 %v83, %v82
    %v92 = vunpack.c.l.b16 %v52
    %v93 = vunpack.c.h.b16 %v52
    %v94 = vunpack.c.l.b16 %v53
    %v95 = vunpack.c.h.b16 %v53
    %v96 = vunpack.c.l.b16 %v54
    %v97 = vunpack.c.h.b16 %v54
    %v98 = vunpack.c.l.b16 %v55
    %v99 = vunpack.c.h.b16 %v55
    %v100 = vpack.c.b16 %v94, %v92
    %v101 = vpack.c.b16 %v95, %v93
    %v102 = vpack.c.b16 %v98, %v96
    %v103 = vpack.c.b16 %v99, %v97
    %vm108 = vcmask 261120
    %v110 = vsel %vm108, %v84, 0
    %v113 = vsel %vm108, %v85, 0
    %v116 = vsel %vm108, %v86, 0
    %v119 = vsel %vm108, %v87, 0
    %121 = vmatprep.subr.bf16.mxu0 0
    %122 = vmatpush1.bf16.msra.mxu0 0
    %123 = vmatprep.subr.bf16.mxu0 0
    %124 = vmatpush1.bf16.msra.mxu0 0
    %125 = vmatprep.subr.bf16.mxu0 0
    %126 = vmatpush1.bf16.msra.mxu0 0
    %127 = vmatprep.subr.bf16.mxu0 0
    %128 = vmatpush1.bf16.msra.mxu0 0
    %129 = vmatprep.subr.bf16.mxu0 0
    %130 = vmatpush1.bf16.msra.mxu0 0
    %131 = vmatprep.subr.bf16.mxu0 0
    %132 = vmatpush1.bf16.msra.mxu0 0
    %133 = vmatprep.subr.bf16.mxu0 %v103
    %134 = vmatpush1.bf16.msra.mxu0 %v102
    %135 = vmatprep.subr.bf16.mxu0 %v101
    %136 = vmatpush1.bf16.msra.mxu0 %v100
    %137 = vmatprep.subr.bf16.mxu0 0
    %138 = vmatpush2.bf16.msra.mxu0 0
    %139 = vmatprep.subr.bf16.mxu0 0
    %140 = vmatpush2.bf16.msra.mxu0 0
    %141 = vmatprep.subr.bf16.mxu0 0
    %142 = vmatpush2.bf16.msra.mxu0 0
    %143 = vmatprep.subr.bf16.mxu0 0
    %144 = vmatpush2.bf16.msra.mxu0 0
    %145 = vmatprep.subr.bf16.mxu0 0
    %146 = vmatpush2.bf16.msra.mxu0 0
    %147 = vmatprep.subr.bf16.mxu0 0
    %148 = vmatpush2.bf16.msra.mxu0 0
    %149 = vmatprep.subr.bf16.mxu0 0
    %150 = vmatpush2.bf16.msra.mxu0 0
    %151 = vmatprep.subr.bf16.mxu0 0
    %152 = vmatpush2.bf16.msra.mxu0 0
    %153 = vmatprep.mubr.bf16.mxu0 0
    %154 = vmatmul.mubr.bf16.gmra.mxu0 %v110
    %v155 = vpop.f32.mrf.mxu0
    %v156 = vadd.f32 %v61, %v155
    %v157 = vpop.f32.mrf.mxu0
    %v158 = vadd.f32 %v65, %v157
    %v159 = vpop.f32.mrf.mxu0
    %v160 = vadd.f32 %v61, %v159
    %v161 = vpop.f32.mrf.mxu0
    %v162 = vadd.f32 %v65, %v161
    %163 = vmatprep.mubr.bf16.mxu0 0
    %164 = vmatmul.mubr.bf16.gmra.mxu0 %v113
    %v165 = vpop.f32.mrf.mxu0
    %v166 = vadd.f32 %v61, %v165
    %v167 = vpop.f32.mrf.mxu0
    %v168 = vadd.f32 %v65, %v167
    %v169 = vpop.f32.mrf.mxu0
    %v170 = vadd.f32 %v61, %v169
    %v171 = vpop.f32.mrf.mxu0
    %v172 = vadd.f32 %v65, %v171
    %173 = vmatprep.mubr.bf16.mxu0 0
    %174 = vmatmul.mubr.bf16.gmra.mxu0 %v116
    %v175 = vpop.f32.mrf.mxu0
    %v176 = vadd.f32 %v61, %v175
    %v177 = vpop.f32.mrf.mxu0
    %v178 = vadd.f32 %v65, %v177
    %v179 = vpop.f32.mrf.mxu0
    %v180 = vadd.f32 %v61, %v179
    %v181 = vpop.f32.mrf.mxu0
    %v182 = vadd.f32 %v65, %v181
    %183 = vmatprep.mubr.bf16.mxu0 0
    %184 = vmatmul.mubr.bf16.gmra.mxu0 %v119
    %v185 = vpop.f32.mrf.mxu0
    %v186 = vadd.f32 %v61, %v185
    %v187 = vpop.f32.mrf.mxu0
    %v188 = vadd.f32 %v65, %v187
    %v189 = vpop.f32.mrf.mxu0
    %v190 = vadd.f32 %v61, %v189
    %v191 = vpop.f32.mrf.mxu0
    %v192 = vadd.f32 %v65, %v191
    %193 = vdwg.mxu0
    %194 = vst [vmem:[#allocation2] sm:$0xff] %v156
    %vm195 = vcmask 523264
    %196 = vst.msk [vmem:[#allocation2 + $0x8] sm:$0xff] %vm195, %v158
    %197 = vst [vmem:[#allocation2 + $0x10] sm:$0xff] %v160
    %198 = vst.msk [vmem:[#allocation2 + $0x18] sm:$0xff] %vm195, %v162
    %199 = vst [vmem:[#allocation2 + $0x20] sm:$0xff] %v166
    %200 = vst.msk [vmem:[#allocation2 + $0x28] sm:$0xff] %vm195, %v168
    %201 = vst [vmem:[#allocation2 + $0x30] sm:$0xff] %v170
    %202 = vst.msk [vmem:[#allocation2 + $0x38] sm:$0xff] %vm195, %v172
    %203 = vst [vmem:[#allocation2 + $0x40] sm:$0xff] %v176
    %204 = vst.msk [vmem:[#allocation2 + $0x48] sm:$0xff] %vm195, %v178
    %205 = vst [vmem:[#allocation2 + $0x50] sm:$0xff] %v180
    %206 = vst.msk [vmem:[#allocation2 + $0x58] sm:$0xff] %vm195, %v182
    %207 = vst [vmem:[#allocation2 + $0x60] sm:$0xff] %v186
    %208 = vst.msk [vmem:[#allocation2 + $0x68] sm:$0xff] %vm195, %v188
    %209 = vst [vmem:[#allocation2 + $0x70] sm:$0xff] %v190
    %210 = vst.msk [vmem:[#allocation2 + $0x78] sm:$0xff] %vm195, %v192
    %v211 = vld [vmem:[%s1] sm:$0xff]
    %212 = vset.pattern.permute.xlu0 0
    %213 = vperm.xlu0 %212, %v211
    %v214 = vpop.permute.xlu0 %213
    %v215 = vld [vmem:[%s5] sm:$0xff]
    %v216 = vld [vmem:[%s5 + $0x8] sm:$0xff]
    %v217 = vld [vmem:[%s5 + $0x10] sm:$0xff]
    %v218 = vld [vmem:[%s5 + $0x18] sm:$0xff]
    %v219 = vld [vmem:[%s5 + $0x20] sm:$0xff]
    %v220 = vld [vmem:[%s5 + $0x28] sm:$0xff]
    %v221 = vld [vmem:[%s5 + $0x30] sm:$0xff]
    %v222 = vld [vmem:[%s5 + $0x38] sm:$0xff]
    %v223 = vld [vmem:[%s6] sm:$0x1]
    %224 = vst.msk [vmem:[#allocation7] sm:$0xff] %vm195, 0.0
    // While loop
    $region34: #{tpu_custom_call.1} parent=1 // loop_pre_header
      _
    $region35: #{tpu_custom_call.1} parent=1 // loop_header
      %s226 = sphi 0, %s228
      %p227 = scmp.ge.s32.totalorder %s226, %s43
    $region36: #{tpu_custom_call.1} parent=1 // loop_header_branch
      %230 = sbr.rel (%p227) target = $region40
    $region37: #{tpu_custom_call.1} parent=1 // loop_body
      %s231 = ssub.s32 %s43, 1
      %s232 = ssub.s32 %s231, %s226
      %v233 = vld [vmem:[#allocation7] sm:$0xff]
      %v234 = vpack.c.bf16 %v233, %v233
      %v243 = vunpack.c.l.b16 %v215
      %v244 = vunpack.c.h.b16 %v215
      %v245 = vunpack.c.l.b16 %v216
      %v246 = vunpack.c.h.b16 %v216
      %v247 = vunpack.c.l.b16 %v217
      %v248 = vunpack.c.h.b16 %v217
      %v249 = vunpack.c.l.b16 %v218
      %v250 = vunpack.c.h.b16 %v218
      %v251 = vunpack.c.l.b16 %v219
      %v252 = vunpack.c.h.b16 %v219
      %v253 = vunpack.c.l.b16 %v220
      %v254 = vunpack.c.h.b16 %v220
      %v255 = vunpack.c.l.b16 %v221
      %v256 = vunpack.c.h.b16 %v221
      %v257 = vunpack.c.l.b16 %v222
      %v258 = vunpack.c.h.b16 %v222
      %v259 = vpack.c.b16 %v245, %v243
      %v260 = vpack.c.b16 %v246, %v244
      %v261 = vpack.c.b16 %v249, %v247
      %v262 = vpack.c.b16 %v250, %v248
      %v263 = vpack.c.b16 %v253, %v251
      %v264 = vpack.c.b16 %v254, %v252
      %v265 = vpack.c.b16 %v257, %v255
      %v266 = vpack.c.b16 %v258, %v256
      %v276 = vsel %vm195, %v234, 0
      %278 = vmatprep.subr.bf16.mxu0 0
      %279 = vmatpush1.bf16.msra.mxu0 0
      %280 = vmatprep.subr.bf16.mxu0 0
      %281 = vmatpush1.bf16.msra.mxu0 0
      %282 = vmatprep.subr.bf16.mxu0 0
      %283 = vmatpush1.bf16.msra.mxu0 0
      %284 = vmatprep.subr.bf16.mxu0 0
      %285 = vmatpush1.bf16.msra.mxu0 0
      %286 = vmatprep.subr.bf16.mxu0 %v266
      %287 = vmatpush1.bf16.msra.mxu0 %v265
      %288 = vmatprep.subr.bf16.mxu0 %v264
      %289 = vmatpush1.bf16.msra.mxu0 %v263
      %290 = vmatprep.subr.bf16.mxu0 %v262
      %291 = vmatpush1.bf16.msra.mxu0 %v261
      %292 = vmatprep.subr.bf16.mxu0 %v260
      %293 = vmatpush1.bf16.msra.mxu0 %v259
      %294 = vmatprep.subr.bf16.mxu0 0
      %295 = vmatpush2.bf16.msra.mxu0 0
      %296 = vmatprep.subr.bf16.mxu0 0
      %297 = vmatpush2.bf16.msra.mxu0 0
      %298 = vmatprep.subr.bf16.mxu0 0
      %299 = vmatpush2.bf16.msra.mxu0 0
      %300 = vmatprep.subr.bf16.mxu0 0
      %301 = vmatpush2.bf16.msra.mxu0 0
      %302 = vmatprep.subr.bf16.mxu0 0
      %303 = vmatpush2.bf16.msra.mxu0 0
      %304 = vmatprep.subr.bf16.mxu0 0
      %305 = vmatpush2.bf16.msra.mxu0 0
      %306 = vmatprep.subr.bf16.mxu0 0
      %307 = vmatpush2.bf16.msra.mxu0 0
      %308 = vmatprep.subr.bf16.mxu0 0
      %309 = vmatpush2.bf16.msra.mxu0 0
      %310 = vmatprep.mubr.bf16.mxu0 0
      %311 = vmatmul.mubr.bf16.gmra.mxu0 %v276
      %v312 = vpop.f32.mrf.mxu0
      %v313 = vadd.f32 0.0, %v312
      %v314 = vpop.f32.mrf.mxu0
      %v315 = vadd.f32 0.0, %v314
      %v316 = vpop.f32.mrf.mxu0
      %v317 = vpop.f32.mrf.mxu0
      %318 = vdwg.mxu0
      %s319 = smul.u32 %s226, 8
      %s320 = sshra.s32 %s319, 3
      %s321 = sand.u32 %s319, 7
      %s322 = smul.u32 %s320, 2
      %s323 = smul.addr %s322, 8
      %s324 = scalar_lea.vmem [#allocation2], %s323
      %v325 = vld [vmem:[%s324] sm:$0xff]
      %s326 = smul.u32 %s232, 8
      %s327 = sshra.s32 %s326, 3
      %s328 = sand.u32 %s326, 7
      %s329 = smul.u32 %s327, 2
      %s330 = smul.addr %s329, 8
      %s331 = scalar_lea.vmem [#allocation2], %s330
      %v332 = vld [vmem:[%s331] sm:$0xff]
      %v333 = vld [vmem:[%s331 + $0x8] sm:$0xff]
      %v334 = vadd.f32 %v325, %v313
      %v335 = vxor.u32 %v334, 2147483648
      %v336 = vmul.f32 %v335, 1.442695
      %v337 = vpow.pop %v336
      %v338 = vadd.f32 %v337, 1.0
      %v339 = vrcp.pop %v338
      %v340 = vmul.f32 1.0, %v339
      %v342 = vlaneseq
      %v343 = vshrl.u32 %v342, 7
      %v344 = vsub.s32 0, %v343
      %v345 = vrot.slane %v223, %v344
      %346 = vrot.lane.b32.xlu0 %v345, 64
      %v347 = vpop.permute.xlu0 %346
      %v349 = vadd.f32 %v313, %v347
      %351 = vrot.lane.b32.xlu0 %v349, 64
      %v352 = vpop.permute.xlu0 %351
      %v354 = vmul.f32 %v340, %v352
      %356 = vrot.lane.b32.xlu0 %v354, 64
      %v357 = vpop.permute.xlu0 %356
      %v359 = vadd.f32 %v325, %v357
      %v360 = vtanh.pop %v359
      %v361 = vsub.f32 1.0, %v340
      %363 = vrot.lane.b32.xlu0 %v360, 96
      %v364 = vpop.permute.xlu0 %363
      %v366 = vmul.f32 %v361, %v364
      %368 = vrot.lane.b32.xlu0 %v233, 32
      %v369 = vpop.permute.xlu0 %368
      %v371 = vmul.f32 %v340, %v369
      %v372 = vadd.f32 %v366, %v371
      %v373 = vadd.f32 %v332, %v313
      %v374 = vadd.f32 %v333, %v315
      %v375 = vxor.u32 %v373, 2147483648
      %v376 = vxor.u32 %v374, 2147483648
      %v377 = vmul.f32 %v375, 1.442695
      %v378 = vpow.pop %v377
      %v379 = vmul.f32 %v376, 1.442695
      %v380 = vpow.pop %v379
      %v381 = vadd.f32 %v378, 1.0
      %v382 = vadd.f32 %v380, 1.0
      %v383 = vrcp.pop %v381
      %v384 = vmul.f32 1.0, %v383
      %v385 = vrcp.pop %v382
      %v386 = vmul.f32 1.0, %v385
      %v388 = vadd.f32 %v315, %v345
      %390 = vrot.lane.b32.xlu0 %v388, 64
      %v391 = vpop.permute.xlu0 %390
      %v393 = vmul.f32 %v384, %v391
      %395 = vrot.lane.b32.xlu0 %v393, 64
      %v396 = vpop.permute.xlu0 %395
      %v398 = vadd.f32 %v333, %v396
      %v399 = vtanh.pop %v398
      %v400 = vsub.f32 1.0, %v386
      %402 = vrot.lane.b32.xlu0 %v399, 96
      %v403 = vpop.permute.xlu0 %402
      %v405 = vmul.f32 %v400, %v403
      %406 = vrot.lane.b32.xlu0 %v233, 96
      %v407 = vpop.permute.xlu0 %406
      %v409 = vmul.f32 %v386, %v407
      %v410 = vadd.f32 %v405, %v409
      %v411 = vstv %s226
      %vm412 = vcmp.gt.s32.totalorder %v214, %v411
      %v413 = vsel %vm412, %v372, %v369
      %415 = vrot.lane.b32.xlu0 %v413, 96
      %v416 = vpop.permute.xlu0 %415
      %418 = vst.msk [vmem:[#allocation7] sm:$0xff] %vm108, %v416
      %v419 = vstv %s232
      %vm420 = vcmp.gt.s32.totalorder %v214, %v419
      %v421 = vsel %vm420, %v410, %v407
      %423 = vrot.lane.b32.xlu0 %v421, 32
      %v424 = vpop.permute.xlu0 %423
      %vm426 = vcmask 523520
      %427 = vst.msk [vmem:[#allocation7] sm:$0xff] %vm426, %v424
    $region38: #{tpu_custom_call.1} parent=1 // loop_footer
      %s228 = sadd.s32 %s226, 1
    $region39: #{tpu_custom_call.1} parent=1 // loop_footer_branch
      %225 = sbr.rel target = $region35
    $region40: #{tpu_custom_call.1} parent=1 // loop_exit
      _
    // Predicated region
    $region41: #{tpu_custom_call.1} parent=1 // pred_check
      _
    $region42: #{tpu_custom_call.1} parent=1 // pred_check_branch
      %429 = sbr.rel (0) target = $region44
    $region43: #{tpu_custom_call.1} parent=1 // pred_region
      %s431 = ssub.s32 128, 128
      %432 = vsyncadd [#allocation6], %s431
      %s434 = sshll.u32 [#allocation7], 4
      %s435 = int_to_ptr.vmem [resolvable:$true] %s434
      %437 = dma.vmem_to_hbm [thread:$0]  %s435, 128, %s7, [#allocation6]
    $region44: #{tpu_custom_call.1} parent=1 // pred_fallthru
      _
    // Predicated region
    $region45: #{tpu_custom_call.1} parent=1 // pred_check
      _
    $region46: #{tpu_custom_call.1} parent=1 // pred_check_branch
      %439 = sbr.rel (0) target = $region48
    $region47: #{tpu_custom_call.1} parent=1 // pred_region
      %440 = dma.done [#allocation6], 128
    $region48: #{tpu_custom_call.1} parent=1 // pred_fallthru
      _
    %441 = vsyncpa [#allocation5], 1
    %442 = vsyncpa [#allocation6], 1

</llo_original>
